<compile_context>
chip_gen: v6e
topology: v6e:2x2x1
jax: 0.10.0
libtpu: 0.0.40
codegen_flags: <defaults>
</compile_context>

<pallas_src>
import functools

import jax
import jax.numpy as jnp
from jax.experimental import pallas as pl
from jax.experimental.pallas import tpu as pltpu


_LANE = 128
_MIN_STEP_BYTES = 1 << 20  # aim to move >= ~1 MiB per grid step


def _round_up(x: int, m: int) -> int:
    return ((x + m - 1) // m) * m


def _sublane_multiple(dtype) -> int:
    # Sublane packing: 8 rows for 4-byte, 16 for 2-byte, 32 for 1-byte dtypes.
    return {4: 8, 2: 16, 1: 32}.get(jnp.dtype(dtype).itemsize, 8)


def _vmem_capacity_bytes() -> int:
    try:
        cap = int(pltpu.get_tpu_info().vmem_capacity_bytes)
        if cap > 0:
            return cap
    except Exception:
        pass
    return 64 * 1024 * 1024  # conservative default (v7x per-TensorCore VMEM)


def _ln_kernel_lanes(x_ref, w_ref, b_ref, o_ref, *, eps: float, inv_c: float):
    # x_ref/o_ref: (B_TILE, C, S_TILE, 128); w_ref/b_ref: (1, C, 1, 1).
    x = x_ref[...].astype(jnp.float32)
    # Channel reduction over a leading axis => plain VALU adds over full vregs.
    s1 = jnp.sum(x, axis=1, keepdims=True)            # (Bt, 1, St, 128)
    s2 = jnp.sum(x * x, axis=1, keepdims=True)        # single pass over x
    mean = s1 * inv_c
    var = jnp.maximum(s2 * inv_c - mean * mean, 0.0)  # biased, like torch
    inv = jax.lax.rsqrt(var + eps)
    w = w_ref[...].astype(jnp.float32)                # (1, C, 1, 1) broadcast
    b = b_ref[...].astype(jnp.float32)
    o_ref[...] = ((x - mean) * inv * w + b).astype(o_ref.dtype)


def _ln_kernel_sublanes(x_ref, w_ref, b_ref, o_ref, *, eps: float, inv_c: float):
    # Fallback (HW not a multiple of 128). x_ref/o_ref: (C, TILE_PIX);
    # w_ref/b_ref: (C, 1).
    x = x_ref[...].astype(jnp.float32)
    s1 = jnp.sum(x, axis=0, keepdims=True)            # (1, T)
    s2 = jnp.sum(x * x, axis=0, keepdims=True)
    mean = s1 * inv_c
    var = jnp.maximum(s2 * inv_c - mean * mean, 0.0)
    inv = jax.lax.rsqrt(var + eps)
    w = w_ref[...].astype(jnp.float32)                # (C, 1)
    b = b_ref[...].astype(jnp.float32)
    o_ref[...] = ((x - mean) * inv * w + b).astype(o_ref.dtype)


def layernorm2d(x, weight, bias, *, eps: float = 1e-6, tile_bytes=None):
    """x: (B, C, H, W); weight/bias: (C,). Returns (B, C, H, W)."""
    B, C, H, W = x.shape
    HW = H * W
    in_itemsize = jnp.dtype(x.dtype).itemsize
    out_itemsize = in_itemsize
    sub = _sublane_multiple(x.dtype)

    vmem_cap = _vmem_capacity_bytes()
    if tile_bytes is None:
        # Per-generation f32 working-set budget per grid step: small on 64 MiB
        # VMEM parts (v7x), larger on 128 MiB parts (v5e/v6e) to amortize the
        # per-step overhead with fewer, bigger steps.
        tile_bytes = (2 << 20) if vmem_cap <= (64 << 20) else (8 << 20)
    # Budget in *f32* elements: the kernel materializes f32 intermediates even
    # for narrow input dtypes, so size by 4 bytes/elem, not the input itemsize.
    budget_elems = max(_LANE * sub, tile_bytes // 4)

    if HW % _LANE == 0:
        # ---- Preferred layout: pixels fill sublanes AND lanes -------------
        S = HW // _LANE
        x_v = x.reshape(B, C, S, _LANE)           # metadata-only reshape
        w_v = weight.reshape(1, C, 1, 1)
        b_v = bias.reshape(1, C, 1, 1)

        per_s_elems = C * _LANE
        max_s = max(1, budget_elems // per_s_elems)
        if S <= max_s or S <= sub:
            s_tile = S                            # full dim (allowed as-is)
        else:
            s_tile = max(sub, (min(max_s, S) // sub) * sub)

        # Small-HW case: group batch rows per step so each step moves >=~1 MiB.
        b_tile = 1
        if s_tile == S and B > 1:
            per_batch_bytes = C * S * _LANE * in_itemsize
            b_tile = min(B, max(1, _MIN_STEP_BYTES // max(1, per_batch_bytes)))
            b_tile = min(b_tile, max(1, budget_elems // (C * S * _LANE)))
            if b_tile > 1 and B * per_batch_bytes >= 4 * _MIN_STEP_BYTES:
                # Keep >= 2 grid steps when there is real work to split across
                # the two v7x TensorCores.
                b_tile = min(b_tile, max(1, B // 2))

        grid = (pl.cdiv(B, b_tile), pl.cdiv(S, s_tile))

        kernel = functools.partial(_ln_kernel_lanes, eps=eps, inv_c=1.0 / C)
        in_specs = [
            pl.BlockSpec((b_tile, C, s_tile, _LANE),
                         lambda bi, si: (bi, 0, si, 0)),
            pl.BlockSpec((1, C, 1, 1), lambda bi, si: (0, 0, 0, 0)),
            pl.BlockSpec((1, C, 1, 1), lambda bi, si: (0, 0, 0, 0)),
        ]
        out_spec = pl.BlockSpec((b_tile, C, s_tile, _LANE),
                                lambda bi, si: (bi, 0, si, 0))
        out_shape = jax.ShapeDtypeStruct((B, C, S, _LANE), x.dtype)
        args = (x_v, w_v, b_v)

        padded_block = b_tile * C * _round_up(s_tile, sub) * _LANE
        param_bytes = 2 * C * 8 * _LANE * 4       # pessimistic padded w/b
    else:
        # ---- Fallback layout: channel on the sublane axis ------------------
        x_v = x.reshape(B, C, HW)
        w_v = weight.reshape(C, 1)
        b_v = bias.reshape(C, 1)

        padded_c = _round_up(C, sub)              # account for sublane padding
        max_pix = max(_LANE, (budget_elems // padded_c // _LANE) * _LANE)
        tile_pix = HW if HW <= max_pix else max_pix
        grid = (B, pl.cdiv(HW, tile_pix))

        kernel = functools.partial(_ln_kernel_sublanes, eps=eps, inv_c=1.0 / C)
        in_specs = [
            pl.BlockSpec((None, C, tile_pix), lambda b, p: (b, 0, p)),
            pl.BlockSpec((C, 1), lambda b, p: (0, 0)),
            pl.BlockSpec((C, 1), lambda b, p: (0, 0)),
        ]
        out_spec = pl.BlockSpec((None, C, tile_pix), lambda b, p: (b, 0, p))
        out_shape = jax.ShapeDtypeStruct((B, C, HW), x.dtype)
        args = (x_v, w_v, b_v)

        padded_block = padded_c * _round_up(tile_pix, _LANE)
        param_bytes = 2 * padded_c * _LANE * 4

    # VMEM limit from the actual footprint: double-buffered input + output
    # (padded), plus headroom for the f32 intermediates in compiler scratch.
    footprint = (2 * padded_block * (in_itemsize + out_itemsize)
                 + 4 * padded_block * 4
                 + param_bytes)
    vmem_limit = int(min(vmem_cap, max(16 << 20, footprint + (8 << 20))))

    out = pl.pallas_call(
        kernel,
        out_shape=out_shape,
        grid_spec=pltpu.PrefetchScalarGridSpec(
            num_scalar_prefetch=0,
            grid=grid,
            in_specs=in_specs,
            out_specs=out_spec,
        ),
        compiler_params=pltpu.CompilerParams(
            dimension_semantics=("parallel", "parallel"),
            vmem_limit_bytes=vmem_limit,
        ),
    )(*args)

    return out.reshape(B, C, H, W)


def _reference(x, weight, bias, eps=1e-6):
    # Pure-JAX reference mirroring nn.LayerNorm over the channel dim (NHWC).
    xt = jnp.transpose(x, (0, 2, 3, 1)).astype(jnp.float32)
    mean = jnp.mean(xt, axis=-1, keepdims=True)
    var = jnp.mean((xt - mean) ** 2, axis=-1, keepdims=True)
    y = (xt - mean) * jax.lax.rsqrt(var + eps) * weight + bias
    return jnp.transpose(y, (0, 3, 1, 2)).astype(x.dtype)


if __name__ == "__main__":
    B, C, H, W = 2, 4, 16, 16
    key = jax.random.PRNGKey(0)
    kx, kw, kb = jax.random.split(key, 3)

    x = jax.random.normal(kx, (B, C, H, W), dtype=jnp.float32)
    # torch default init is ones/zeros; use deterministic non-trivial values so
    # the affine path is exercised.
    weight = 1.0 + 0.1 * jax.random.normal(kw, (C,), dtype=jnp.float32)
    bias = 0.1 * jax.random.normal(kb, (C,), dtype=jnp.float32)

    out = layernorm2d(x, weight, bias, eps=1e-6)
    out = jax.block_until_ready(out)

    ref = _reference(x, weight, bias, eps=1e-6)
    assert out.shape == (B, C, H, W)
    assert jnp.allclose(out, ref, atol=1e-5, rtol=1e-5), "mismatch vs reference"

    print("KERNEL_OK")
</pallas_src>

<mosaic_0001>
module attributes {stable_mosaic.version = 11 : i64} {
  func.func @_ln_kernel_lanes(%arg0: i32, %arg1: i32, %arg2: memref<2x4x2x128xf32, #tpu.memory_space<vmem>>, %arg3: memref<1x4x1x1xf32, #tpu.memory_space<vmem>>, %arg4: memref<1x4x1x1xf32, #tpu.memory_space<vmem>>, %arg5: memref<2x4x2x128xf32, #tpu.memory_space<vmem>>) attributes {dimension_semantics = [#tpu.dimension_semantics<parallel>, #tpu.dimension_semantics<parallel>], iteration_bounds = array<i64: 1, 1>, scalar_prefetch = 0 : i64, scratch_operands = 0 : i64, tpu.core_type = #tpu.core_type<tc>, window_params = [{transform_indices = @transform_0, window_bounds = array<i64: 2, 4, 2, 128>}, {pipeline_mode = #tpu.pipeline_mode<synchronous>, transform_indices = @transform_1, window_bounds = array<i64: 1, 4, 1, 1>}, {pipeline_mode = #tpu.pipeline_mode<synchronous>, transform_indices = @transform_2, window_bounds = array<i64: 1, 4, 1, 1>}, {transform_indices = @transform_3, window_bounds = array<i64: 2, 4, 2, 128>}]} {
    %c0 = arith.constant 0 : index
    %c0_0 = arith.constant 0 : index
    %c0_1 = arith.constant 0 : index
    %c0_2 = arith.constant 0 : index
    %0 = vector.load %arg2[%c0, %c0_0, %c0_1, %c0_2] : memref<2x4x2x128xf32, #tpu.memory_space<vmem>>, vector<2x4x2x128xf32>
    %cst = arith.constant dense<0.000000e+00> : vector<2x2x128xf32>
    %1 = vector.multi_reduction <add>, %0, %cst [1] : vector<2x4x2x128xf32> to vector<2x2x128xf32>
    %2 = vector.shape_cast %1 : vector<2x2x128xf32> to vector<2x1x2x128xf32>
    %3 = arith.mulf %0, %0 : vector<2x4x2x128xf32>
    %cst_3 = arith.constant dense<0.000000e+00> : vector<2x2x128xf32>
    %4 = vector.multi_reduction <add>, %3, %cst_3 [1] : vector<2x4x2x128xf32> to vector<2x2x128xf32>
    %5 = vector.shape_cast %4 : vector<2x2x128xf32> to vector<2x1x2x128xf32>
    %cst_4 = arith.constant 2.500000e-01 : f32
    %6 = vector.broadcast %cst_4 : f32 to vector<2x1x2x128xf32>
    %7 = arith.mulf %2, %6 : vector<2x1x2x128xf32>
    %cst_5 = arith.constant 2.500000e-01 : f32
    %8 = vector.broadcast %cst_5 : f32 to vector<2x1x2x128xf32>
    %9 = arith.mulf %5, %8 : vector<2x1x2x128xf32>
    %10 = arith.mulf %7, %7 : vector<2x1x2x128xf32>
    %11 = arith.subf %9, %10 : vector<2x1x2x128xf32>
    %cst_6 = arith.constant 0.000000e+00 : f32
    %12 = vector.broadcast %cst_6 : f32 to vector<2x1x2x128xf32>
    %13 = arith.maximumf %11, %12 : vector<2x1x2x128xf32>
    %cst_7 = arith.constant 9.99999997E-7 : f32
    %14 = vector.broadcast %cst_7 : f32 to vector<2x1x2x128xf32>
    %15 = arith.addf %13, %14 : vector<2x1x2x128xf32>
    %16 = math.rsqrt %15 : vector<2x1x2x128xf32>
    %c0_8 = arith.constant 0 : index
    %c0_9 = arith.constant 0 : index
    %c0_10 = arith.constant 0 : index
    %c0_11 = arith.constant 0 : index
    %17 = vector.load %arg3[%c0_8, %c0_9, %c0_10, %c0_11] : memref<1x4x1x1xf32, #tpu.memory_space<vmem>>, vector<1x4x1x1xf32>
    %c0_12 = arith.constant 0 : index
    %c0_13 = arith.constant 0 : index
    %c0_14 = arith.constant 0 : index
    %c0_15 = arith.constant 0 : index
    %18 = vector.load %arg4[%c0_12, %c0_13, %c0_14, %c0_15] : memref<1x4x1x1xf32, #tpu.memory_space<vmem>>, vector<1x4x1x1xf32>
    %19 = vector.broadcast %7 : vector<2x1x2x128xf32> to vector<2x4x2x128xf32>
    %20 = arith.subf %0, %19 : vector<2x4x2x128xf32>
    %21 = vector.broadcast %16 : vector<2x1x2x128xf32> to vector<2x4x2x128xf32>
    %22 = arith.mulf %20, %21 : vector<2x4x2x128xf32>
    %23 = vector.broadcast %17 : vector<1x4x1x1xf32> to vector<2x4x2x128xf32>
    %24 = arith.mulf %22, %23 : vector<2x4x2x128xf32>
    %25 = vector.broadcast %18 : vector<1x4x1x1xf32> to vector<2x4x2x128xf32>
    %26 = arith.addf %24, %25 : vector<2x4x2x128xf32>
    %c0_16 = arith.constant 0 : index
    %c0_17 = arith.constant 0 : index
    %c0_18 = arith.constant 0 : index
    %c0_19 = arith.constant 0 : index
    %27 = vector.load %arg5[%c0_16, %c0_17, %c0_18, %c0_19] : memref<2x4x2x128xf32, #tpu.memory_space<vmem>>, vector<2x4x2x128xf32>
    tpu.vector_store %arg5[%c0_16, %c0_17, %c0_18, %c0_19], %26 {strides = array<i32>} : memref<2x4x2x128xf32, #tpu.memory_space<vmem>>, vector<2x4x2x128xf32>,
    return
  }
  func.func @transform_0(%arg0: i32, %arg1: i32) -> (i32, i32, i32, i32) {
    %c0_i32 = arith.constant 0 : i32
    %c0_i32_0 = arith.constant 0 : i32
    %c0_i32_1 = arith.constant 0 : i32
    return %arg0, %c0_i32, %arg1, %c0_i32_0 : i32, i32, i32, i32
  }
  func.func @transform_1(%arg0: i32, %arg1: i32) -> (i32, i32, i32, i32) {
    %c0_i32 = arith.constant 0 : i32
    %c0_i32_0 = arith.constant 0 : i32
    %c0_i32_1 = arith.constant 0 : i32
    %c0_i32_2 = arith.constant 0 : i32
    %c0_i32_3 = arith.constant 0 : i32
    return %c0_i32, %c0_i32_0, %c0_i32_1, %c0_i32_2 : i32, i32, i32, i32
  }
  func.func @transform_2(%arg0: i32, %arg1: i32) -> (i32, i32, i32, i32) {
    %c0_i32 = arith.constant 0 : i32
    %c0_i32_0 = arith.constant 0 : i32
    %c0_i32_1 = arith.constant 0 : i32
    %c0_i32_2 = arith.constant 0 : i32
    %c0_i32_3 = arith.constant 0 : i32
    return %c0_i32, %c0_i32_0, %c0_i32_1, %c0_i32_2 : i32, i32, i32, i32
  }
  func.func @transform_3(%arg0: i32, %arg1: i32) -> (i32, i32, i32, i32) {
    %c0_i32 = arith.constant 0 : i32
    %c0_i32_0 = arith.constant 0 : i32
    %c0_i32_1 = arith.constant 0 : i32
    return %arg0, %c0_i32, %arg1, %c0_i32_0 : i32, i32, i32, i32
  }
}

</mosaic_0001>

<llo_original>
// kernel: tpu_custom_call.1
$region0: #{tpu_custom_call.1}
  #allocation0 [shape = 'u32[]', space=smem, size = 0x4, offset = 0x4, fixed_abs, tag = 'smem constant byte address 0x4 - core index']
  #allocation1 [shape = 'u32[144,128]{1,0:T(1,128)}', space=vmem, size = 0x12000, scoped, tag = 'internal scratch']
  %s0 = inlined_call_operand.hbm [shape: f32[2,4,2,128], index: 0, kind: input, shape index: {}]
  %s1 = inlined_call_operand.vmem [shape: f32[1,4,1,1], index: 1, kind: input, shape index: {}]
  %s2 = inlined_call_operand.vmem [shape: f32[1,4,1,1], index: 2, kind: input, shape index: {}]
  %s3 = inlined_call_operand.hbm [shape: f32[2,4,2,128], index: 3, kind: output, shape index: {}]
  %s4 = sld [smem:[#allocation0]]
  $region26: #{tpu_custom_call.1} parent=0
    _
  %s6 = ssub.s32 1, %s4
  %s7 = scalar_select 0, %s6, %s4
  $region1: #{tpu_custom_call.1} parent=0
    #allocation2 [shape = 'u8[8192]{0}', space=vmem, size = 0x2000, scoped, tag = 'input window, operand 0, single buffered']
    #allocation3 [shape = 's32[1]{0}', space=sflag, size = 0x4, scoped, tag = 'scoped memory for tpu_custom_call.1']
    #allocation4 [shape = 's32[1]{0}', space=sflag, size = 0x4, scoped, tag = 'scoped memory for tpu_custom_call.1']
    #allocation5 [shape = 'u8[8192]{0}', space=vmem, size = 0x2000, scoped, tag = 'output window, operand 0, single buffered']
    %8 = vsyncpa [#allocation3], 0
    %9 = vsyncpa [#allocation4], 0
    // Predicated region
    $region2: #{tpu_custom_call.1} parent=1 // pred_check
      _
    $region3: #{tpu_custom_call.1} parent=1 // pred_check_branch
      %11 = sbr.rel (0) target = $region5
    $region4: #{tpu_custom_call.1} parent=1 // pred_region
      %s13 = ssub.s32 256, 256
      %14 = vsyncadd [#allocation3], %s13
      %s15 = sshll.u32 [#allocation2], 4
      %s16 = int_to_ptr.vmem [resolvable:$true] %s15
      %21 = dma.hbm_to_vmem [thread:$0]  %s0, 256, %s16, [#allocation3], 32, 32, 2
    $region5: #{tpu_custom_call.1} parent=1 // pred_fallthru
      _
    // Predicated region
    $region6: #{tpu_custom_call.1} parent=1 // pred_check
      _
    $region7: #{tpu_custom_call.1} parent=1 // pred_check_branch
      %23 = sbr.rel (0) target = $region9
    $region8: #{tpu_custom_call.1} parent=1 // pred_region
      _
    $region9: #{tpu_custom_call.1} parent=1 // pred_fallthru
      _
    // Predicated region
    $region10: #{tpu_custom_call.1} parent=1 // pred_check
      _
    $region11: #{tpu_custom_call.1} parent=1 // pred_check_branch
      %25 = sbr.rel (0) target = $region13
    $region12: #{tpu_custom_call.1} parent=1 // pred_region
      _
    $region13: #{tpu_custom_call.1} parent=1 // pred_fallthru
      _
    // Predicated region
    $region14: #{tpu_custom_call.1} parent=1 // pred_check
      _
    $region15: #{tpu_custom_call.1} parent=1 // pred_check_branch
      %27 = sbr.rel (0) target = $region17
    $region16: #{tpu_custom_call.1} parent=1 // pred_region
      %28 = dma.done [#allocation3], 256
    $region17: #{tpu_custom_call.1} parent=1 // pred_fallthru
      _
    %v29 = vld [vmem:[#allocation2] sm:$0x3]
    %v30 = vld [vmem:[#allocation2 + $0x2] sm:$0x3]
    %v31 = vld [vmem:[#allocation2 + $0x4] sm:$0x3]
    %v32 = vld [vmem:[#allocation2 + $0x6] sm:$0x3]
    %v33 = vld [vmem:[#allocation2 + $0x8] sm:$0x3]
    %v34 = vld [vmem:[#allocation2 + $0xa] sm:$0x3]
    %v35 = vld [vmem:[#allocation2 + $0xc] sm:$0x3]
    %v36 = vld [vmem:[#allocation2 + $0xe] sm:$0x3]
    %vm37 = vcmask 1041408
    %v38 = vsel %vm37, %v29, 0.0
    %v39 = vsel %vm37, %v30, 0.0
    %v40 = vadd.f32 %v38, %v39
    %v41 = vsel %vm37, %v31, 0.0
    %v42 = vadd.f32 %v40, %v41
    %v43 = vsel %vm37, %v32, 0.0
    %v44 = vadd.f32 %v42, %v43
    %v45 = vsel %vm37, %v33, 0.0
    %v46 = vsel %vm37, %v34, 0.0
    %v47 = vadd.f32 %v45, %v46
    %v48 = vsel %vm37, %v35, 0.0
    %v49 = vadd.f32 %v47, %v48
    %v50 = vsel %vm37, %v36, 0.0
    %v51 = vadd.f32 %v49, %v50
    %v52 = vmul.f32 %v29, %v29
    %v53 = vmul.f32 %v30, %v30
    %v54 = vmul.f32 %v31, %v31
    %v55 = vmul.f32 %v32, %v32
    %v56 = vmul.f32 %v33, %v33
    %v57 = vmul.f32 %v34, %v34
    %v58 = vmul.f32 %v35, %v35
    %v59 = vmul.f32 %v36, %v36
    %v60 = vsel %vm37, %v52, 0.0
    %v61 = vsel %vm37, %v53, 0.0
    %v62 = vadd.f32 %v60, %v61
    %v63 = vsel %vm37, %v54, 0.0
    %v64 = vadd.f32 %v62, %v63
    %v65 = vsel %vm37, %v55, 0.0
    %v66 = vadd.f32 %v64, %v65
    %v67 = vsel %vm37, %v56, 0.0
    %v68 = vsel %vm37, %v57, 0.0
    %v69 = vadd.f32 %v67, %v68
    %v70 = vsel %vm37, %v58, 0.0
    %v71 = vadd.f32 %v69, %v70
    %v72 = vsel %vm37, %v59, 0.0
    %v73 = vadd.f32 %v71, %v72
    %v74 = vmul.f32 %v44, 0.25
    %v75 = vmul.f32 %v51, 0.25
    %v76 = vmul.f32 %v66, 0.25
    %v77 = vmul.f32 %v73, 0.25
    %v78 = vmul.f32 %v74, %v74
    %v79 = vmul.f32 %v75, %v75
    %v80 = vsub.f32 %v76, %v78
    %v81 = vsub.f32 %v77, %v79
    %v82 = vmax.f32 %v80, 0.0
    %v83 = vmax.f32 %v81, 0.0
    %v84 = vadd.f32 %v82, 1e-06
    %v85 = vadd.f32 %v83, 1e-06
    %v86 = vrsqrt.pop %v84
    %v87 = vrsqrt.pop %v85
    %v88 = vld [vmem:[%s1] sm:$0x1]
    %v89 = vld [vmem:[%s1 + $0x1] sm:$0x1]
    %v90 = vld [vmem:[%s1 + $0x2] sm:$0x1]
    %v91 = vld [vmem:[%s1 + $0x3] sm:$0x1]
    %v92 = vld [vmem:[%s2] sm:$0x1]
    %v93 = vld [vmem:[%s2 + $0x1] sm:$0x1]
    %v94 = vld [vmem:[%s2 + $0x2] sm:$0x1]
    %v95 = vld [vmem:[%s2 + $0x3] sm:$0x1]
    %v96 = vsub.f32 %v29, %v74
    %v97 = vsub.f32 %v30, %v74
    %v98 = vsub.f32 %v31, %v74
    %v99 = vsub.f32 %v32, %v74
    %v100 = vsub.f32 %v33, %v75
    %v101 = vsub.f32 %v34, %v75
    %v102 = vsub.f32 %v35, %v75
    %v103 = vsub.f32 %v36, %v75
    %v104 = vmul.f32 %v96, %v86
    %v105 = vmul.f32 %v97, %v86
    %v106 = vmul.f32 %v98, %v86
    %v107 = vmul.f32 %v99, %v86
    %v108 = vmul.f32 %v100, %v87
    %v109 = vmul.f32 %v101, %v87
    %v110 = vmul.f32 %v102, %v87
    %v111 = vmul.f32 %v103, %v87
    %v116 = vlaneseq
    %v117 = vshrl.u32 %v116, 7
    %v118 = vsub.s32 0, %v117
    %v119 = vrot.slane %v88, %v118
    %v120 = vlaneseq
    %v121 = vshrl.u32 %v120, 7
    %v122 = vsub.s32 0, %v121
    %v123 = vrot.slane %v89, %v122
    %v124 = vlaneseq
    %v125 = vshrl.u32 %v124, 7
    %v126 = vsub.s32 0, %v125
    %v127 = vrot.slane %v90, %v126
    %v128 = vlaneseq
    %v129 = vshrl.u32 %v128, 7
    %v130 = vsub.s32 0, %v129
    %v131 = vrot.slane %v91, %v130
    %132 = vset.pattern.permute.xlu0 0
    %133 = vperm.xlu0 %132, %v119
    %v134 = vpop.permute.xlu0 %133
    %136 = vset.pattern.permute.xlu0 0
    %137 = vperm.xlu0 %136, %v123
    %v138 = vpop.permute.xlu0 %137
    %140 = vset.pattern.permute.xlu0 0
    %141 = vperm.xlu0 %140, %v127
    %v142 = vpop.permute.xlu0 %141
    %144 = vset.pattern.permute.xlu0 0
    %145 = vperm.xlu0 %144, %v131
    %v146 = vpop.permute.xlu0 %145
    %v148 = vmul.f32 %v104, %v134
    %v149 = vmul.f32 %v105, %v138
    %v150 = vmul.f32 %v106, %v142
    %v151 = vmul.f32 %v107, %v146
    %v152 = vmul.f32 %v108, %v134
    %v153 = vmul.f32 %v109, %v138
    %v154 = vmul.f32 %v110, %v142
    %v155 = vmul.f32 %v111, %v146
    %v160 = vlaneseq
    %v161 = vshrl.u32 %v160, 7
    %v162 = vsub.s32 0, %v161
    %v163 = vrot.slane %v92, %v162
    %v164 = vlaneseq
    %v165 = vshrl.u32 %v164, 7
    %v166 = vsub.s32 0, %v165
    %v167 = vrot.slane %v93, %v166
    %v168 = vlaneseq
    %v169 = vshrl.u32 %v168, 7
    %v170 = vsub.s32 0, %v169
    %v171 = vrot.slane %v94, %v170
    %v172 = vlaneseq
    %v173 = vshrl.u32 %v172, 7
    %v174 = vsub.s32 0, %v173
    %v175 = vrot.slane %v95, %v174
    %176 = vset.pattern.permute.xlu0 0
    %177 = vperm.xlu0 %176, %v163
    %v178 = vpop.permute.xlu0 %177
    %180 = vset.pattern.permute.xlu0 0
    %181 = vperm.xlu0 %180, %v167
    %v182 = vpop.permute.xlu0 %181
    %184 = vset.pattern.permute.xlu0 0
    %185 = vperm.xlu0 %184, %v171
    %v186 = vpop.permute.xlu0 %185
    %188 = vset.pattern.permute.xlu0 0
    %189 = vperm.xlu0 %188, %v175
    %v190 = vpop.permute.xlu0 %189
    %v192 = vadd.f32 %v148, %v178
    %v193 = vadd.f32 %v149, %v182
    %v194 = vadd.f32 %v150, %v186
    %v195 = vadd.f32 %v151, %v190
    %v196 = vadd.f32 %v152, %v178
    %v197 = vadd.f32 %v153, %v182
    %v198 = vadd.f32 %v154, %v186
    %v199 = vadd.f32 %v155, %v190
    %200 = vst [vmem:[#allocation5] sm:$0x3] %v192
    %201 = vst [vmem:[#allocation5 + $0x2] sm:$0x3] %v193
    %202 = vst [vmem:[#allocation5 + $0x4] sm:$0x3] %v194
    %203 = vst [vmem:[#allocation5 + $0x6] sm:$0x3] %v195
    %204 = vst [vmem:[#allocation5 + $0x8] sm:$0x3] %v196
    %205 = vst [vmem:[#allocation5 + $0xa] sm:$0x3] %v197
    %206 = vst [vmem:[#allocation5 + $0xc] sm:$0x3] %v198
    %207 = vst [vmem:[#allocation5 + $0xe] sm:$0x3] %v199
    // Predicated region
    $region18: #{tpu_custom_call.1} parent=1 // pred_check
      _
    $region19: #{tpu_custom_call.1} parent=1 // pred_check_branch
      %209 = sbr.rel (0) target = $region21
    $region20: #{tpu_custom_call.1} parent=1 // pred_region
      %s211 = ssub.s32 256, 256
      %212 = vsyncadd [#allocation4], %s211
      %s213 = sshll.u32 [#allocation5], 4
      %s214 = int_to_ptr.vmem [resolvable:$true] %s213
      %219 = dma.vmem_to_hbm [thread:$0]  %s214, 256, %s3, [#allocation4], 32, 32, 2
    $region21: #{tpu_custom_call.1} parent=1 // pred_fallthru
      _
    // Predicated region
    $region22: #{tpu_custom_call.1} parent=1 // pred_check
      _
    $region23: #{tpu_custom_call.1} parent=1 // pred_check_branch
      %221 = sbr.rel (0) target = $region25
    $region24: #{tpu_custom_call.1} parent=1 // pred_region
      %222 = dma.done [#allocation4], 256
    $region25: #{tpu_custom_call.1} parent=1 // pred_fallthru
      _
    %223 = vsyncpa [#allocation3], 1
    %224 = vsyncpa [#allocation4], 1

</llo_original>
